<compile_context>
chip_gen: v5e
topology: v5e:2x2
jax: 0.10.0
libtpu: 0.0.40
codegen_flags: <defaults>
</compile_context>

<pallas_src>
import jax
import jax.numpy as jnp
from jax.experimental import pallas as pl
from jax.experimental.pallas import tpu as pltpu


def seq_film_fused_kernel(x_ref, w_ref, b_ref, o_ref):
    """out[i] = W_eff[i] @ x[i] + b_eff[i] for each batch row in the block.

    W_eff / b_eff already fold Conv1 -> FiLM1 -> Conv2 -> FiLM2 (see wrapper), so this is
    one MXU pass + bias per (batch row, T-tile).  The leading block dim is a small
    compile-time constant, hence the static unrolled loop of plain 2-D dots.
    """
    f32 = jnp.float32
    for i in range(x_ref.shape[0]):
        h = jnp.dot(w_ref[i], x_ref[i], preferred_element_type=f32)   # (C, tt) f32 acc
        h = h + b_ref[i].astype(f32)                                  # (C, 1) lane-broadcast
        o_ref[i] = h.astype(o_ref.dtype)                              # cast only on store


def _round_up(v, m):
    return ((v + m - 1) // m) * m


def _pick_t_tile(T, cap, min_tiles=1):
    """Largest lane-dense (multiple-of-128) tile <= cap, or full T when T <= cap.

    The grid uses pl.cdiv(T, tt): Pallas masks the tail block, so tt need not divide T.
    """
    tt = T if T <= cap else max(128, (cap // 128) * 128)
    if min_tiles > 1 and T >= 256 and pl.cdiv(T, tt) < min_tiles:
        # keep >= min_tiles grid steps so both v7x TensorCores get work
        tt = max(128, _round_up(pl.cdiv(T, min_tiles), 128))
    return tt


def _vmem_bytes(bb, C, tt, itemsize):
    # double-buffered x/out tiles + double-buffered W_eff/b_eff + in-kernel f32 result
    xo = 2 * 2 * bb * C * tt * itemsize
    wb = 2 * bb * C * (C * itemsize + 4)
    acc = bb * C * tt * 4
    return xo + wb + acc


def sequential_with_film(x, cond, params, *, t_tile=2048):
    """x: (B, C, T), cond: (B, D). Returns (B, C, T) with x.dtype."""
    w1, b1, wb1, bb1, wg1, bg1, w2, b2, wb2, bb2, wg2, bg2 = params
    B, C, T = x.shape
    f32 = jnp.float32

    # --- Fold Conv1 -> FiLM1 -> Conv2 -> FiLM2 into one per-batch matmul. Tiny batch-only
    # work done once per call in plain JAX (not per T-tile inside the kernel), f32 math. ---
    cond32 = cond.astype(f32)
    g1 = cond32 @ wg1.astype(f32).T + bg1[:, 0] + 1.0     # gamma1 + 1, (B, C)
    be1 = cond32 @ wb1.astype(f32).T + bb1[:, 0]          # beta1,      (B, C)
    g2 = cond32 @ wg2.astype(f32).T + bg2[:, 0] + 1.0     # gamma2 + 1, (B, C)
    be2 = cond32 @ wb2.astype(f32).T + bb2[:, 0]          # beta2,      (B, C)

    w1f = w1.astype(f32)
    w2f = w2.astype(f32)
    # W_eff = diag(g2) @ W2 @ diag(g1) @ W1                       (B, C, C)
    w_eff = g2[:, :, None] * jnp.einsum('ij,bjk->bik', w2f, g1[:, :, None] * w1f[None])
    # b_eff = g2 * (W2 @ (g1 * b1 + beta1) + b2) + beta2          (B, C, 1)
    inner = g1 * b1[:, 0].astype(f32) + be1
    mid = inner @ w2f.T + b2[:, 0].astype(f32)
    b_eff = (g2 * mid + be2)[:, :, None]
    # Stream weights in the activation dtype (bf16 x -> bf16 MXU operands, f32 acc kept
    # via preferred_element_type); bias stays f32 for the final add.
    w_eff = w_eff.astype(x.dtype)

    itemsize = jnp.dtype(x.dtype).itemsize

    # Small-C / small-B: fold the whole batch into the block so each grid step moves a
    # bigger payload (mem-bound regime); otherwise one batch row per step.
    fold_batch = (B <= 8) and (B * C * C * itemsize <= (2 << 20))
    bb = B if fold_batch else 1
    nb = B // bb

    tt = _pick_t_tile(T, t_tile, min_tiles=2 if nb == 1 else 1)
    budget = 24 << 20   # safe under v7x's 64 MiB physical VMEM with headroom
    while tt > 128 and _vmem_bytes(bb, C, tt, itemsize) > budget:
        tt = max(128, ((tt // 2) // 128) * 128)
    nt = pl.cdiv(T, tt)

    grid_spec = pltpu.PrefetchScalarGridSpec(
        num_scalar_prefetch=0,
        grid=(nb, nt),
        in_specs=[
            # streamed per (batch-group, T-tile); lane-dense tt -> unmasked stores
            pl.BlockSpec((bb, C, tt), lambda b, t: (b, 0, t)),    # x
            # per-batch fused weights/bias: block index changes only when b changes
            pl.BlockSpec((bb, C, C), lambda b, t: (b, 0, 0)),     # W_eff
            pl.BlockSpec((bb, C, 1), lambda b, t: (b, 0, 0)),     # b_eff
        ],
        out_specs=pl.BlockSpec((bb, C, tt), lambda b, t: (b, 0, t)),
    )

    est = _vmem_bytes(bb, C, tt, itemsize)
    cp_kwargs = dict(dimension_semantics=("parallel", "parallel"))
    if est > (12 << 20):
        # Raise the scoped-VMEM limit only when needed; cap well under v7x's 64 MiB.
        cp_kwargs["vmem_limit_bytes"] = int(min(48 << 20, max(2 * est, 32 << 20)))

    return pl.pallas_call(
        seq_film_fused_kernel,
        out_shape=jax.ShapeDtypeStruct((B, C, T), x.dtype),
        grid_spec=grid_spec,
        compiler_params=pltpu.CompilerParams(**cp_kwargs),
    )(x, w_eff, b_eff)


def init_params(key, C, D):
    """Deterministic init mirroring PyTorch default Linear/Conv1d init shapes.

    Conv1d(C, C, 1) weight (C, C, 1) is stored squeezed as (C, C).
    Conv / FiLM-Linear biases are stored as (C, 1) columns.
    """
    def lin(k, out_dim, in_dim):
        bound = float(in_dim) ** -0.5
        kw, kb = jax.random.split(k)
        w = jax.random.uniform(kw, (out_dim, in_dim), jnp.float32, -bound, bound)
        b = jax.random.uniform(kb, (out_dim, 1), jnp.float32, -bound, bound)
        return w, b

    ks = jax.random.split(key, 6)
    w1, b1 = lin(ks[0], C, C)      # Conv1d #1
    wb1, bb1 = lin(ks[1], C, D)    # FiLM #1 beta
    wg1, bg1 = lin(ks[2], C, D)    # FiLM #1 gamma
    w2, b2 = lin(ks[3], C, C)      # Conv1d #2
    wb2, bb2 = lin(ks[4], C, D)    # FiLM #2 beta
    wg2, bg2 = lin(ks[5], C, D)    # FiLM #2 gamma
    return (w1, b1, wb1, bb1, wg1, bg1, w2, b2, wb2, bb2, wg2, bg2)


def reference(x, cond, params):
    """Pure-JAX reproduction of the PyTorch SequentialWithFiLM forward (unfused order)."""
    w1, b1, wb1, bb1, wg1, bg1, w2, b2, wb2, bb2, wg2, bg2 = params

    def film(h, r, wb, bb, wg, bg):
        beta = r @ wb.T + bb[:, 0]     # (B, C)
        gamma = r @ wg.T + bg[:, 0]    # (B, C)
        return h * (gamma[:, :, None] + 1.0) + beta[:, :, None]

    h = jnp.einsum('oc,bct->bot', w1, x) + b1[None, :, :]
    h = film(h, cond, wb1, bb1, wg1, bg1)
    h = jnp.einsum('oc,bct->bot', w2, h) + b2[None, :, :]
    h = film(h, cond, wb2, bb2, wg2, bg2)
    return h


if __name__ == "__main__":
    B, C, T, D = 2, 8, 1024, 16   # -> batch folded into the block, two 512-wide T tiles

    key = jax.random.PRNGKey(0)
    kx, kc, kp = jax.random.split(key, 3)
    x = jax.random.normal(kx, (B, C, T), jnp.float32)
    cond = jax.random.normal(kc, (B, D), jnp.float32)
    params = init_params(kp, C, D)

    out = sequential_with_film(x, cond, params)
    out = jax.block_until_ready(out)

    ref = reference(x, cond, params)
    assert out.shape == (B, C, T)
    # Fold changes accumulation order slightly; tolerance covers the reordering.
    assert jnp.allclose(out, ref, atol=2e-4, rtol=2e-4), "mismatch vs JAX reference"

    print("KERNEL_OK")
</pallas_src>

<mosaic_0001>
module attributes {stable_mosaic.version = 11 : i64} {
  func.func @seq_film_fused_kernel(%arg0: i32, %arg1: i32, %arg2: memref<2x8x512xf32, #tpu.memory_space<vmem>>, %arg3: memref<2x8x8xf32, #tpu.memory_space<vmem>>, %arg4: memref<2x8x1xf32, #tpu.memory_space<vmem>>, %arg5: memref<2x8x512xf32, #tpu.memory_space<vmem>>) attributes {dimension_semantics = [#tpu.dimension_semantics<parallel>, #tpu.dimension_semantics<parallel>], iteration_bounds = array<i64: 1, 2>, scalar_prefetch = 0 : i64, scratch_operands = 0 : i64, tpu.core_type = #tpu.core_type<tc>, window_params = [{transform_indices = @transform_0, window_bounds = array<i64: 2, 8, 512>}, {transform_indices = @transform_1, window_bounds = array<i64: 2, 8, 8>}, {transform_indices = @transform_2, window_bounds = array<i64: 2, 8, 1>}, {transform_indices = @transform_3, window_bounds = array<i64: 2, 8, 512>}]} {
    %c0 = arith.constant 0 : index
    %c0_0 = arith.constant 0 : index
    %c0_1 = arith.constant 0 : index
    %0 = vector.load %arg3[%c0, %c0_0, %c0_1] : memref<2x8x8xf32, #tpu.memory_space<vmem>>, vector<1x8x8xf32>
    %1 = vector.shape_cast %0 : vector<1x8x8xf32> to vector<8x8xf32>
    %c0_2 = arith.constant 0 : index
    %c0_3 = arith.constant 0 : index
    %c0_4 = arith.constant 0 : index
    %2 = vector.load %arg2[%c0_2, %c0_3, %c0_4] : memref<2x8x512xf32, #tpu.memory_space<vmem>>, vector<1x8x512xf32>
    %3 = vector.shape_cast %2 : vector<1x8x512xf32> to vector<8x512xf32>
    %cst = arith.constant dense<0.000000e+00> : vector<8x512xf32>
    %4 = tpu.matmul %1, %3, %cst {dimension_numbers = #tpu.dot_dimension_numbers<[1], [0], [0], [1], [0, 0, 1, 1], [], []>} : vector<8x8xf32>, vector<8x512xf32>, vector<8x512xf32> -> vector<8x512xf32>
    %c0_5 = arith.constant 0 : index
    %c0_6 = arith.constant 0 : index
    %c0_7 = arith.constant 0 : index
    %5 = vector.load %arg4[%c0_5, %c0_6, %c0_7] : memref<2x8x1xf32, #tpu.memory_space<vmem>>, vector<1x8x1xf32>
    %6 = vector.shape_cast %5 : vector<1x8x1xf32> to vector<8x1xf32>
    %7 = vector.broadcast %6 : vector<8x1xf32> to vector<8x512xf32>
    %8 = arith.addf %4, %7 : vector<8x512xf32>
    %c0_8 = arith.constant 0 : index
    %c0_9 = arith.constant 0 : index
    %c0_10 = arith.constant 0 : index
    %9 = vector.load %arg5[%c0_8, %c0_9, %c0_10] : memref<2x8x512xf32, #tpu.memory_space<vmem>>, vector<1x8x512xf32>
    %10 = vector.shape_cast %9 : vector<1x8x512xf32> to vector<8x512xf32>
    %11 = vector.shape_cast %8 : vector<8x512xf32> to vector<1x8x512xf32>
    tpu.vector_store %arg5[%c0_8, %c0_9, %c0_10], %11 {strides = array<i32>} : memref<2x8x512xf32, #tpu.memory_space<vmem>>, vector<1x8x512xf32>,
    %c1 = arith.constant 1 : index
    %c0_11 = arith.constant 0 : index
    %c0_12 = arith.constant 0 : index
    %12 = vector.load %arg3[%c1, %c0_11, %c0_12] : memref<2x8x8xf32, #tpu.memory_space<vmem>>, vector<1x8x8xf32>
    %13 = vector.shape_cast %12 : vector<1x8x8xf32> to vector<8x8xf32>
    %c1_13 = arith.constant 1 : index
    %c0_14 = arith.constant 0 : index
    %c0_15 = arith.constant 0 : index
    %14 = vector.load %arg2[%c1_13, %c0_14, %c0_15] : memref<2x8x512xf32, #tpu.memory_space<vmem>>, vector<1x8x512xf32>
    %15 = vector.shape_cast %14 : vector<1x8x512xf32> to vector<8x512xf32>
    %cst_16 = arith.constant dense<0.000000e+00> : vector<8x512xf32>
    %16 = tpu.matmul %13, %15, %cst_16 {dimension_numbers = #tpu.dot_dimension_numbers<[1], [0], [0], [1], [0, 0, 1, 1], [], []>} : vector<8x8xf32>, vector<8x512xf32>, vector<8x512xf32> -> vector<8x512xf32>
    %c1_17 = arith.constant 1 : index
    %c0_18 = arith.constant 0 : index
    %c0_19 = arith.constant 0 : index
    %17 = vector.load %arg4[%c1_17, %c0_18, %c0_19] : memref<2x8x1xf32, #tpu.memory_space<vmem>>, vector<1x8x1xf32>
    %18 = vector.shape_cast %17 : vector<1x8x1xf32> to vector<8x1xf32>
    %19 = vector.broadcast %18 : vector<8x1xf32> to vector<8x512xf32>
    %20 = arith.addf %16, %19 : vector<8x512xf32>
    %c1_20 = arith.constant 1 : index
    %c0_21 = arith.constant 0 : index
    %c0_22 = arith.constant 0 : index
    %21 = vector.load %arg5[%c1_20, %c0_21, %c0_22] : memref<2x8x512xf32, #tpu.memory_space<vmem>>, vector<1x8x512xf32>
    %22 = vector.shape_cast %21 : vector<1x8x512xf32> to vector<8x512xf32>
    %23 = vector.shape_cast %20 : vector<8x512xf32> to vector<1x8x512xf32>
    tpu.vector_store %arg5[%c1_20, %c0_21, %c0_22], %23 {strides = array<i32>} : memref<2x8x512xf32, #tpu.memory_space<vmem>>, vector<1x8x512xf32>,
    return
  }
  func.func @transform_0(%arg0: i32, %arg1: i32) -> (i32, i32, i32) {
    %c0_i32 = arith.constant 0 : i32
    %c0_i32_0 = arith.constant 0 : i32
    return %arg0, %c0_i32, %arg1 : i32, i32, i32
  }
  func.func @transform_1(%arg0: i32, %arg1: i32) -> (i32, i32, i32) {
    %c0_i32 = arith.constant 0 : i32
    %c0_i32_0 = arith.constant 0 : i32
    %c0_i32_1 = arith.constant 0 : i32
    return %arg0, %c0_i32, %c0_i32_0 : i32, i32, i32
  }
  func.func @transform_2(%arg0: i32, %arg1: i32) -> (i32, i32, i32) {
    %c0_i32 = arith.constant 0 : i32
    %c0_i32_0 = arith.constant 0 : i32
    %c0_i32_1 = arith.constant 0 : i32
    return %arg0, %c0_i32, %c0_i32_0 : i32, i32, i32
  }
  func.func @transform_3(%arg0: i32, %arg1: i32) -> (i32, i32, i32) {
    %c0_i32 = arith.constant 0 : i32
    %c0_i32_0 = arith.constant 0 : i32
    return %arg0, %c0_i32, %arg1 : i32, i32, i32
  }
}

</mosaic_0001>

<llo_original>
// kernel: tpu_custom_call.1
$region0: #{tpu_custom_call.1}
  #allocation0 [shape = 'u32[]', space=smem, size = 0x4, offset = 0x4, fixed_abs, tag = 'smem constant byte address 0x4 - core index']
  #allocation1 [shape = 'u32[72,128]{1,0:T(1,128)}', space=vmem, size = 0x9000, scoped, tag = 'internal scratch']
  %s0 = inlined_call_operand.hbm [shape: f32[2,8,1024], index: 0, kind: input, shape index: {}]
  %s1 = inlined_call_operand.vmem [shape: f32[2,8,8], index: 1, kind: input, shape index: {}]
  %s2 = inlined_call_operand.vmem [shape: f32[2,8,1], index: 2, kind: input, shape index: {}]
  %s3 = inlined_call_operand.hbm [shape: f32[2,8,1024], index: 3, kind: output, shape index: {}]
  %s4 = sld [smem:[#allocation0]]
  $region49: #{tpu_custom_call.1} parent=0
    _
  %s6 = ssub.s32 1, %s4
  %s7 = scalar_select 0, %s6, %s4
  $region1: #{tpu_custom_call.1} parent=0
    #allocation2 [shape = 'u8[65536]{0}', space=vmem, size = 0x10000, scoped, tag = 'input window, operand 0']
    #allocation3 [shape = 's32[2]{0}', space=sflag, size = 0x8, scoped, tag = 'scoped memory for tpu_custom_call.1']
    #allocation4 [shape = 's32[2]{0}', space=sflag, size = 0x8, scoped, tag = 'scoped memory for tpu_custom_call.1']
    #allocation5 [shape = 'u8[65536]{0}', space=vmem, size = 0x10000, scoped, tag = 'output window, operand 0']
    %8 = vsyncpa [#allocation3], 0
    %s9 = scalar_lea.sflag [#allocation3], 1
    %10 = vsyncpa %s9, 0
    %11 = vsyncpa [#allocation4], 0
    %s12 = scalar_lea.sflag [#allocation4], 1
    %13 = vsyncpa %s12, 0
    loop: start=0, step=1, limit=4
    $region2: #{tpu_custom_call.1} parent=1 // loop_pre_header
      _
    $region3: #{tpu_custom_call.1} parent=1 // loop_header
      %s15 = sphi 0, %s19
      %p16 = scmp.ge.s32.totalorder %s15, 4
      %s22 = sphi 0, %s34
      %s23 = sphi 0, %s30
      %s24 = sphi 0, %s22
      %s25 = sphi 0, %s23
      %s26 = sphi 0, %s24
      %s27 = sphi 0, %s25
      %s39 = sphi 0, %s41
      %s42 = sphi 0, %s39
      %s43 = sphi 0, %s42
      %s59 = sphi 0, %s43
      %s65 = sphi 0, %s67
      %s68 = sphi 0, %s65
      %s69 = sphi 0, %s68
      %s85 = sphi 0, %s69
      %s91 = sphi 0, %s93
      %s94 = sphi 0, %s91
      %s95 = sphi 0, %s94
      %s111 = sphi 0, %s95
      %s119 = sphi 0, %s121
      %s122 = sphi 0, %s119
      %s123 = sphi 0, %s122
      %s139 = sphi 0, %s123
    $region4: #{tpu_custom_call.1} parent=1 // loop_header_branch
      %18 = sbr.rel (%p16) target = $region8
    $region5: #{tpu_custom_call.1} parent=1 // loop_body
      %s20 = ssub.s32 %s15, 1
      %s21 = ssub.s32 %s15, 2
      %s28 = sadd.s32 1, %s23
      %p29 = scmp.ge.s32.totalorder %s28, 2
      %s30 = scalar_select %p29, 0, %s28
      %s31 = sadd.s32 1, %s22
      %s32 = scalar_select %p29, %s31, %s22
      %p33 = scmp.ge.s32.totalorder %s32, 1
      %s34 = scalar_select %p33, 0, %s32
      %s35 = ssub.s32 %s22, %s34
      %s36 = ssub.s32 %s23, %s30
      %s37 = sor.u32 %s35, %s36
      %p38 = scmp.eq.s32.totalorder %s37, 0
      %s40 = sadd.s32 %s39, 1
      %s41 = scalar_select %p38, %s39, %s40
      %p44 = pneg %p38
      %p45 = scmp.eq.s32.totalorder %s15, 1
      %p46 = por %p44, %p45
      %p47 = scmp.ne.s32.totalorder %s39, %s42
      %p48 = scmp.eq.s32.totalorder %s15, 0
      %p49 = por %p47, %p48
      %p50 = scmp.ne.s32.totalorder %s39, %s42
      %p51 = scmp.eq.s32.totalorder %s20, 1
      %p52 = por %p50, %p51
      %p53 = scmp.ne.s32.totalorder %s42, %s43
      %p54 = scmp.eq.s32.totalorder %s20, 0
      %p55 = por %p53, %p54
      %p56 = scmp.ne.s32.totalorder %s42, %s43
      %p57 = scmp.eq.s32.totalorder %s21, 1
      %p58 = por %p56, %p57
      %p60 = scmp.ne.s32.totalorder %s43, %s59
      %p61 = scmp.eq.s32.totalorder %s21, 0
      %p62 = por %p60, %p61
      %s63 = ssub.s32 %s22, %s34
      %p64 = scmp.eq.s32.totalorder %s63, 0
      %s66 = sadd.s32 %s65, 1
      %s67 = scalar_select %p64, %s65, %s66
      %p70 = pneg %p64
      %p71 = scmp.eq.s32.totalorder %s15, 1
      %p72 = por %p70, %p71
      %p73 = scmp.ne.s32.totalorder %s65, %s68
      %p74 = scmp.eq.s32.totalorder %s15, 0
      %p75 = por %p73, %p74
      %p76 = scmp.ne.s32.totalorder %s65, %s68
      %p77 = scmp.eq.s32.totalorder %s20, 1
      %p78 = por %p76, %p77
      %p79 = scmp.ne.s32.totalorder %s68, %s69
      %p80 = scmp.eq.s32.totalorder %s20, 0
      %p81 = por %p79, %p80
      %p82 = scmp.ne.s32.totalorder %s68, %s69
      %p83 = scmp.eq.s32.totalorder %s21, 1
      %p84 = por %p82, %p83
      %p86 = scmp.ne.s32.totalorder %s69, %s85
      %p87 = scmp.eq.s32.totalorder %s21, 0
      %p88 = por %p86, %p87
      %s89 = ssub.s32 %s22, %s34
      %p90 = scmp.eq.s32.totalorder %s89, 0
      %s92 = sadd.s32 %s91, 1
      %s93 = scalar_select %p90, %s91, %s92
      %p96 = pneg %p90
      %p97 = scmp.eq.s32.totalorder %s15, 1
      %p98 = por %p96, %p97
      %p99 = scmp.ne.s32.totalorder %s91, %s94
      %p100 = scmp.eq.s32.totalorder %s15, 0
      %p101 = por %p99, %p100
      %p102 = scmp.ne.s32.totalorder %s91, %s94
      %p103 = scmp.eq.s32.totalorder %s20, 1
      %p104 = por %p102, %p103
      %p105 = scmp.ne.s32.totalorder %s94, %s95
      %p106 = scmp.eq.s32.totalorder %s20, 0
      %p107 = por %p105, %p106
      %p108 = scmp.ne.s32.totalorder %s94, %s95
      %p109 = scmp.eq.s32.totalorder %s21, 1
      %p110 = por %p108, %p109
      %p112 = scmp.ne.s32.totalorder %s95, %s111
      %p113 = scmp.eq.s32.totalorder %s21, 0
      %p114 = por %p112, %p113
      %s115 = ssub.s32 %s22, %s34
      %s116 = ssub.s32 %s23, %s30
      %s117 = sor.u32 %s115, %s116
      %p118 = scmp.eq.s32.totalorder %s117, 0
      %s120 = sadd.s32 %s119, 1
      %s121 = scalar_select %p118, %s119, %s120
      %p124 = pneg %p118
      %p125 = scmp.eq.s32.totalorder %s15, 1
      %p126 = por %p124, %p125
      %p127 = scmp.ne.s32.totalorder %s119, %s122
      %p128 = scmp.eq.s32.totalorder %s15, 0
      %p129 = por %p127, %p128
      %p130 = scmp.ne.s32.totalorder %s119, %s122
      %p131 = scmp.eq.s32.totalorder %s20, 1
      %p132 = por %p130, %p131
      %p133 = scmp.ne.s32.totalorder %s122, %s123
      %p134 = scmp.eq.s32.totalorder %s20, 0
      %p135 = por %p133, %p134
      %p136 = scmp.ne.s32.totalorder %s122, %s123
      %p137 = scmp.eq.s32.totalorder %s21, 1
      %p138 = por %p136, %p137
      %p140 = scmp.ne.s32.totalorder %s123, %s139
      %p141 = scmp.eq.s32.totalorder %s21, 0
      %p142 = por %p140, %p141
      %p143 = scmp.le.s32.totalorder 1, %s15
      %p144 = scmp.lt.s32.totalorder %s15, 3
      %p145 = pnand %p143, %p144
      %p146 = pneg %p145
      // Predicated region
      $region9: #{tpu_custom_call.1} parent=5 // pred_check
        _
      $region10: #{tpu_custom_call.1} parent=5 // pred_check_branch
        %148 = sbr.rel (%p145) target = $region12
      $region11: #{tpu_custom_call.1} parent=5 // pred_region
        %s149 = ssub.s32 %s15, 1
        // Predicated region
        $region13: #{tpu_custom_call.1} parent=11 // pred_check
          %p150 = pneg %p81
        $region14: #{tpu_custom_call.1} parent=11 // pred_check_branch
          %152 = sbr.rel (%p150) target = $region16
        $region15: #{tpu_custom_call.1} parent=11 // pred_region
          %s153 = smul.u32 2, %s24
          %p154 = scmp.lt.s32.totalorder %s153, 1
          %s155 = scalar_select %p154, %s153, 1
          %s156 = smul.addr %s155, 8
          %s157 = scalar_lea.vmem %s1, %s156
          %s158 = smul.u32 2, %s24
        $region16: #{tpu_custom_call.1} parent=11 // pred_fallthru
          _
        // Predicated region
        $region17: #{tpu_custom_call.1} parent=11 // pred_check
          %p159 = pneg %p107
        $region18: #{tpu_custom_call.1} parent=11 // pred_check_branch
          %161 = sbr.rel (%p159) target = $region20
        $region19: #{tpu_custom_call.1} parent=11 // pred_region
          %s162 = smul.u32 2, %s24
          %p163 = scmp.lt.s32.totalorder %s162, 1
          %s164 = scalar_select %p163, %s162, 1
          %s165 = smul.addr %s164, 8
          %s166 = scalar_lea.vmem %s2, %s165
          %s167 = smul.u32 2, %s24
        $region20: #{tpu_custom_call.1} parent=11 // pred_fallthru
          _
      $region12: #{tpu_custom_call.1} parent=5 // pred_fallthru
        _
      %p168 = scmp.lt.s32.totalorder %s15, 2
      // Predicated region
      $region21: #{tpu_custom_call.1} parent=5 // pred_check
        %p169 = pneg %p168
      $region22: #{tpu_custom_call.1} parent=5 // pred_check_branch
        %171 = sbr.rel (%p169) target = $region24
      $region23: #{tpu_custom_call.1} parent=5 // pred_region
        // Predicated region
        $region25: #{tpu_custom_call.1} parent=23 // pred_check
          %p172 = pneg %p49
        $region26: #{tpu_custom_call.1} parent=23 // pred_check_branch
          %174 = sbr.rel (%p172) target = $region28
        $region27: #{tpu_custom_call.1} parent=23 // pred_region
          %s175 = sand.u32 %s39, 1
          %s176 = scalar_lea.sflag [#allocation3], %s175
          %s177 = sand.u32 %s39, 1
          %s178 = smul.addr %s177, 64
          %s179 = scalar_lea.vmem [#allocation2], %s178
          %s180 = smul.u32 2, %s22
          %s181 = smul.u32 4, %s23
          %183 = vsyncadd %s176, 0
          %s184 = smul.addr %s180, 8
          %s185 = sadd.s32 %s181, %s184
          %s186 = smul.addr %s185, 8
          %s187 = scalar_lea.hbm %s0, %s186
          %s188 = sshll.u32 %s187, 4
          %s189 = int_to_ptr.hbm [resolvable:$true] %s188
          %s190 = sshll.u32 %s179, 4
          %s191 = int_to_ptr.vmem [resolvable:$true] %s190
          %196 = dma.hbm_to_vmem [thread:$0]  %s189, 1024, %s191, %s176, 1024, 512, 32
        $region28: #{tpu_custom_call.1} parent=23 // pred_fallthru
          _
      $region24: #{tpu_custom_call.1} parent=5 // pred_fallthru
        _
      %p197 = scmp.le.s32.totalorder 1, %s15
      %p198 = scmp.lt.s32.totalorder %s15, 3
      %p199 = pnand %p197, %p198
      %p200 = pneg %p199
      // Predicated region
      $region29: #{tpu_custom_call.1} parent=5 // pred_check
        _
      $region30: #{tpu_custom_call.1} parent=5 // pred_check_branch
        %202 = sbr.rel (%p199) target = $region32
      $region31: #{tpu_custom_call.1} parent=5 // pred_region
        %s203 = ssub.s32 %s15, 1
        %s204 = sand.u32 %s42, 1
        %s205 = scalar_lea.sflag [#allocation3], %s204
        %s206 = sand.u32 %s42, 1
        %s207 = smul.addr %s206, 64
        %s208 = scalar_lea.vmem [#allocation2], %s207
        // Predicated region
        $region33: #{tpu_custom_call.1} parent=31 // pred_check
          %p209 = pneg %p55
        $region34: #{tpu_custom_call.1} parent=31 // pred_check_branch
          %211 = sbr.rel (%p209) target = $region36
        $region35: #{tpu_custom_call.1} parent=31 // pred_region
          %213 = dma.done %s205, 1024
        $region36: #{tpu_custom_call.1} parent=31 // pred_fallthru
          _
        %s214 = sand.u32 %s42, 1
        %s215 = scalar_lea.sflag [#allocation3], %s214
        %s216 = sand.u32 %s42, 1
        %s217 = smul.addr %s216, 64
        %s218 = scalar_lea.vmem [#allocation2], %s217
        %p219 = pneg %p55
        %p220 = pneg %p52
        %s221 = smul.u32 2, %s24
        %p222 = scmp.lt.s32.totalorder %s221, 1
        %s223 = scalar_select %p222, %s221, 1
        %s224 = smul.addr %s223, 8
        %s225 = scalar_lea.vmem %s1, %s224
        %p226 = pneg %p81
        %p227 = pneg %p78
        %s228 = smul.u32 2, %s24
        %p229 = scmp.lt.s32.totalorder %s228, 1
        %s230 = scalar_select %p229, %s228, 1
        %s231 = smul.addr %s230, 8
        %s232 = scalar_lea.vmem %s2, %s231
        %p233 = pneg %p107
        %p234 = pneg %p104
        %p235 = pneg %p135
        %p236 = pneg %p132
        %s237 = sand.u32 %s122, 1
        %s238 = scalar_lea.sflag [#allocation4], %s237
        %s239 = sand.u32 %s122, 1
        %s240 = smul.addr %s239, 64
        %s241 = scalar_lea.vmem [#allocation5], %s240
        %s242 = smul.u32 2, %s24
        %s243 = smul.u32 4, %s25
        %s244 = smul.u32 2, %s24
        %p245 = scmp.lt.s32.totalorder %s244, 1
        %s246 = scalar_select %p245, %s244, 1
        %s247 = smul.addr %s246, 8
        %s248 = scalar_lea.vmem %s1, %s247
        %s249 = smul.u32 2, %s24
        %s250 = smul.u32 2, %s24
        %p251 = scmp.lt.s32.totalorder %s250, 1
        %s252 = scalar_select %p251, %s250, 1
        %s253 = smul.addr %s252, 8
        %s254 = scalar_lea.vmem %s2, %s253
        %s255 = smul.u32 2, %s24
        %s256 = smul.u32 2, %s24
        %s257 = smul.u32 4, %s25
        %v258 = vld [vmem:[%s248] sm:$0xff]
        %v259 = vld [vmem:[%s208] sm:$0xff]
        %v260 = vld [vmem:[%s208 + $0x8] sm:$0xff]
        %v261 = vld [vmem:[%s208 + $0x10] sm:$0xff]
        %v262 = vld [vmem:[%s208 + $0x18] sm:$0xff]
        %v263 = vld [vmem:[%s254] sm:$0xff]
        %265 = vset.pattern.permute.xlu0 0
        %266 = vperm.xlu0 %265, %v263
        %v267 = vpop.permute.xlu0 %266
        %vm269 = vcmask 64512
        %v271 = vsel %vm269, %v258, 0
        %273 = vmatpush.msra.mxu0 0.0
        %274 = vmatpush.msra.mxu0 0.0
        %275 = vmatpush.msra.mxu0 0.0
        %276 = vmatpush.msra.mxu0 0.0
        %277 = vmatpush.msra.mxu0 0.0
        %278 = vmatpush.msra.mxu0 0.0
        %279 = vmatpush.msra.mxu0 0.0
        %280 = vmatpush.msra.mxu0 0.0
        %281 = vmatpush.msra.mxu0 0.0
        %282 = vmatpush.msra.mxu0 0.0
        %283 = vmatpush.msra.mxu0 0.0
        %284 = vmatpush.msra.mxu0 0.0
        %285 = vmatpush.msra.mxu0 0.0
        %286 = vmatpush.msra.mxu0 0.0
        %287 = vmatpush.msra.mxu0 0.0
        %288 = vmatpush.msra.mxu0 %v259
        %289 = vmatmul.f32.gmra.mxu0 %v271
        %v290 = vpop.f32.mrf.mxu0
        %v291 = vadd.f32 %v267, %v290
        %292 = vdwg.mxu0
        %293 = vmatpush.msra.mxu0 0.0
        %294 = vmatpush.msra.mxu0 0.0
        %295 = vmatpush.msra.mxu0 0.0
        %296 = vmatpush.msra.mxu0 0.0
        %297 = vmatpush.msra.mxu0 0.0
        %298 = vmatpush.msra.mxu0 0.0
        %299 = vmatpush.msra.mxu0 0.0
        %300 = vmatpush.msra.mxu0 0.0
        %301 = vmatpush.msra.mxu0 0.0
        %302 = vmatpush.msra.mxu0 0.0
        %303 = vmatpush.msra.mxu0 0.0
        %304 = vmatpush.msra.mxu0 0.0
        %305 = vmatpush.msra.mxu0 0.0
        %306 = vmatpush.msra.mxu0 0.0
        %307 = vmatpush.msra.mxu0 0.0
        %308 = vmatpush.msra.mxu0 %v260
        %309 = vmatmul.f32.gmra.mxu0 %v271
        %v310 = vpop.f32.mrf.mxu0
        %v311 = vadd.f32 %v267, %v310
        %312 = vdwg.mxu0
        %313 = vmatpush.msra.mxu0 0.0
        %314 = vmatpush.msra.mxu0 0.0
        %315 = vmatpush.msra.mxu0 0.0
        %316 = vmatpush.msra.mxu0 0.0
        %317 = vmatpush.msra.mxu0 0.0
        %318 = vmatpush.msra.mxu0 0.0
        %319 = vmatpush.msra.mxu0 0.0
        %320 = vmatpush.msra.mxu0 0.0
        %321 = vmatpush.msra.mxu0 0.0
        %322 = vmatpush.msra.mxu0 0.0
        %323 = vmatpush.msra.mxu0 0.0
        %324 = vmatpush.msra.mxu0 0.0
        %325 = vmatpush.msra.mxu0 0.0
        %326 = vmatpush.msra.mxu0 0.0
        %327 = vmatpush.msra.mxu0 0.0
        %328 = vmatpush.msra.mxu0 %v261
        %329 = vmatmul.f32.gmra.mxu0 %v271
        %v330 = vpop.f32.mrf.mxu0
        %v331 = vadd.f32 %v267, %v330
        %332 = vdwg.mxu0
        %333 = vmatpush.msra.mxu0 0.0
        %334 = vmatpush.msra.mxu0 0.0
        %335 = vmatpush.msra.mxu0 0.0
        %336 = vmatpush.msra.mxu0 0.0
        %337 = vmatpush.msra.mxu0 0.0
        %338 = vmatpush.msra.mxu0 0.0
        %339 = vmatpush.msra.mxu0 0.0
        %340 = vmatpush.msra.mxu0 0.0
        %341 = vmatpush.msra.mxu0 0.0
        %342 = vmatpush.msra.mxu0 0.0
        %343 = vmatpush.msra.mxu0 0.0
        %344 = vmatpush.msra.mxu0 0.0
        %345 = vmatpush.msra.mxu0 0.0
        %346 = vmatpush.msra.mxu0 0.0
        %347 = vmatpush.msra.mxu0 0.0
        %348 = vmatpush.msra.mxu0 %v262
        %349 = vmatmul.f32.gmra.mxu0 %v271
        %v350 = vpop.f32.mrf.mxu0
        %v351 = vadd.f32 %v267, %v350
        %352 = vdwg.mxu0
        %353 = vst [vmem:[%s241] sm:$0xff] %v291
        %354 = vst [vmem:[%s241 + $0x8] sm:$0xff] %v311
        %355 = vst [vmem:[%s241 + $0x10] sm:$0xff] %v331
        %356 = vst [vmem:[%s241 + $0x18] sm:$0xff] %v351
        %s357 = scalar_lea.vmem %s248, 8
        %v358 = vld [vmem:[%s357] sm:$0xff]
        %s359 = scalar_lea.vmem %s208, 32 [#allocation2]
        %v360 = vld [vmem:[%s359] sm:$0xff]
        %v361 = vld [vmem:[%s359 + $0x8] sm:$0xff]
        %v362 = vld [vmem:[%s359 + $0x10] sm:$0xff]
        %v363 = vld [vmem:[%s359 + $0x18] sm:$0xff]
        %s364 = scalar_lea.vmem %s254, 8
        %v365 = vld [vmem:[%s364] sm:$0xff]
        %367 = vset.pattern.permute.xlu0 0
        %368 = vperm.xlu0 %367, %v365
        %v369 = vpop.permute.xlu0 %368
        %v372 = vsel %vm269, %v358, 0
        %374 = vmatpush.msra.mxu0 0.0
        %375 = vmatpush.msra.mxu0 0.0
        %376 = vmatpush.msra.mxu0 0.0
        %377 = vmatpush.msra.mxu0 0.0
        %378 = vmatpush.msra.mxu0 0.0
        %379 = vmatpush.msra.mxu0 0.0
        %380 = vmatpush.msra.mxu0 0.0
        %381 = vmatpush.msra.mxu0 0.0
        %382 = vmatpush.msra.mxu0 0.0
        %383 = vmatpush.msra.mxu0 0.0
        %384 = vmatpush.msra.mxu0 0.0
        %385 = vmatpush.msra.mxu0 0.0
        %386 = vmatpush.msra.mxu0 0.0
        %387 = vmatpush.msra.mxu0 0.0
        %388 = vmatpush.msra.mxu0 0.0
        %389 = vmatpush.msra.mxu0 %v360
        %390 = vmatmul.f32.gmra.mxu0 %v372
        %v391 = vpop.f32.mrf.mxu0
        %v392 = vadd.f32 %v369, %v391
        %393 = vdwg.mxu0
        %394 = vmatpush.msra.mxu0 0.0
        %395 = vmatpush.msra.mxu0 0.0
        %396 = vmatpush.msra.mxu0 0.0
        %397 = vmatpush.msra.mxu0 0.0
        %398 = vmatpush.msra.mxu0 0.0
        %399 = vmatpush.msra.mxu0 0.0
        %400 = vmatpush.msra.mxu0 0.0
        %401 = vmatpush.msra.mxu0 0.0
        %402 = vmatpush.msra.mxu0 0.0
        %403 = vmatpush.msra.mxu0 0.0
        %404 = vmatpush.msra.mxu0 0.0
        %405 = vmatpush.msra.mxu0 0.0
        %406 = vmatpush.msra.mxu0 0.0
        %407 = vmatpush.msra.mxu0 0.0
        %408 = vmatpush.msra.mxu0 0.0
        %409 = vmatpush.msra.mxu0 %v361
        %410 = vmatmul.f32.gmra.mxu0 %v372
        %v411 = vpop.f32.mrf.mxu0
        %v412 = vadd.f32 %v369, %v411
        %413 = vdwg.mxu0
        %414 = vmatpush.msra.mxu0 0.0
        %415 = vmatpush.msra.mxu0 0.0
        %416 = vmatpush.msra.mxu0 0.0
        %417 = vmatpush.msra.mxu0 0.0
        %418 = vmatpush.msra.mxu0 0.0
        %419 = vmatpush.msra.mxu0 0.0
        %420 = vmatpush.msra.mxu0 0.0
        %421 = vmatpush.msra.mxu0 0.0
        %422 = vmatpush.msra.mxu0 0.0
        %423 = vmatpush.msra.mxu0 0.0
        %424 = vmatpush.msra.mxu0 0.0
        %425 = vmatpush.msra.mxu0 0.0
        %426 = vmatpush.msra.mxu0 0.0
        %427 = vmatpush.msra.mxu0 0.0
        %428 = vmatpush.msra.mxu0 0.0
        %429 = vmatpush.msra.mxu0 %v362
        %430 = vmatmul.f32.gmra.mxu0 %v372
        %v431 = vpop.f32.mrf.mxu0
        %v432 = vadd.f32 %v369, %v431
        %433 = vdwg.mxu0
        %434 = vmatpush.msra.mxu0 0.0
        %435 = vmatpush.msra.mxu0 0.0
        %436 = vmatpush.msra.mxu0 0.0
        %437 = vmatpush.msra.mxu0 0.0
        %438 = vmatpush.msra.mxu0 0.0
        %439 = vmatpush.msra.mxu0 0.0
        %440 = vmatpush.msra.mxu0 0.0
        %441 = vmatpush.msra.mxu0 0.0
        %442 = vmatpush.msra.mxu0 0.0
        %443 = vmatpush.msra.mxu0 0.0
        %444 = vmatpush.msra.mxu0 0.0
        %445 = vmatpush.msra.mxu0 0.0
        %446 = vmatpush.msra.mxu0 0.0
        %447 = vmatpush.msra.mxu0 0.0
        %448 = vmatpush.msra.mxu0 0.0
        %449 = vmatpush.msra.mxu0 %v363
        %450 = vmatmul.f32.gmra.mxu0 %v372
        %v451 = vpop.f32.mrf.mxu0
        %v452 = vadd.f32 %v369, %v451
        %453 = vdwg.mxu0
        %s454 = scalar_lea.vmem %s241, 32 [#allocation5]
        %455 = vst [vmem:[%s454] sm:$0xff] %v392
        %456 = vst [vmem:[%s454 + $0x8] sm:$0xff] %v412
        %457 = vst [vmem:[%s454 + $0x10] sm:$0xff] %v432
        %458 = vst [vmem:[%s454 + $0x18] sm:$0xff] %v452
        %s459 = sand.u32 %s122, 1
        %s460 = scalar_lea.sflag [#allocation4], %s459
        %s461 = sand.u32 %s122, 1
        %s462 = smul.addr %s461, 64
        %s463 = scalar_lea.vmem [#allocation5], %s462
        // Predicated region
        $region37: #{tpu_custom_call.1} parent=31 // pred_check
          %p464 = pneg %p132
        $region38: #{tpu_custom_call.1} parent=31 // pred_check_branch
          %466 = sbr.rel (%p464) target = $region40
        $region39: #{tpu_custom_call.1} parent=31 // pred_region
          %s467 = smul.u32 2, %s24
          %s468 = smul.u32 4, %s25
          %470 = vsyncadd %s460, 0
          %s471 = smul.addr %s467, 8
          %s472 = sadd.s32 %s468, %s471
          %s473 = smul.addr %s472, 8
          %s474 = scalar_lea.hbm %s3, %s473
          %s475 = sshll.u32 %s463, 4
          %s476 = int_to_ptr.vmem [resolvable:$true] %s475
          %s477 = sshll.u32 %s474, 4
          %s478 = int_to_ptr.hbm [resolvable:$true] %s477
          %483 = dma.vmem_to_hbm [thread:$0]  %s476, 1024, %s478, %s460, 512, 1024, 32
        $region40: #{tpu_custom_call.1} parent=31 // pred_fallthru
          _
      $region32: #{tpu_custom_call.1} parent=5 // pred_fallthru
        _
      %p484 = scmp.le.s32.totalorder 2, %s15
      // Predicated region
      $region41: #{tpu_custom_call.1} parent=5 // pred_check
        %p485 = pneg %p484
      $region42: #{tpu_custom_call.1} parent=5 // pred_check_branch
        %487 = sbr.rel (%p485) target = $region44
      $region43: #{tpu_custom_call.1} parent=5 // pred_region
        %s488 = ssub.s32 %s15, 2
        // Predicated region
        $region45: #{tpu_custom_call.1} parent=43 // pred_check
          %p489 = pneg %p138
        $region46: #{tpu_custom_call.1} parent=43 // pred_check_branch
          %491 = sbr.rel (%p489) target = $region48
        $region47: #{tpu_custom_call.1} parent=43 // pred_region
          %s492 = sand.u32 %s123, 1
          %s493 = scalar_lea.sflag [#allocation4], %s492
          %s494 = sand.u32 %s123, 1
          %s495 = smul.addr %s494, 64
          %s496 = scalar_lea.vmem [#allocation5], %s495
          %498 = dma.done %s493, 1024
        $region48: #{tpu_custom_call.1} parent=43 // pred_fallthru
          _
      $region44: #{tpu_custom_call.1} parent=5 // pred_fallthru
        _
    $region6: #{tpu_custom_call.1} parent=1 // loop_footer
      %s19 = sadd.s32 1, %s15
    $region7: #{tpu_custom_call.1} parent=1 // loop_footer_branch
      %14 = sbr.rel target = $region3
    $region8: #{tpu_custom_call.1} parent=1 // loop_exit
      _
    %499 = vsyncpa [#allocation3], 1
    %s500 = scalar_lea.sflag [#allocation3], 1
    %501 = vsyncpa %s500, 1
    %502 = vsyncpa [#allocation4], 1
    %s503 = scalar_lea.sflag [#allocation4], 1
    %504 = vsyncpa %s503, 1

</llo_original>
